<compile_context>
chip_gen: v5e
topology: v5e:2x2
jax: 0.10.0
libtpu: 0.0.40
codegen_flags: <defaults>
</compile_context>

<pallas_src>
import functools

import numpy as np

import jax
import jax.numpy as jnp
from jax import lax
from jax.experimental import pallas as pl
from jax.experimental.pallas import tpu as pltpu

_BN_EPS = 1e-5
# Above v5e's 16 MiB scoped-VMEM default, comfortably inside v7x's 64 MiB physical VMEM.
_VMEM_LIMIT_BYTES = 48 * 1024 * 1024


# ------------------------------- small helpers -------------------------------


def _round_up(n, m):
    return ((n + m - 1) // m) * m


def _pick_tile(n, pref, align):
    """Return (padded_extent, tile). Single full tile when small, else `pref`-sized tiles."""
    n_al = _round_up(max(n, 1), align)
    if n_al <= pref:
        return n_al, n_al
    return _round_up(n, pref), pref


def _pad_w(w, rows, cols):
    return jnp.pad(w, ((0, rows - w.shape[0]), (0, cols - w.shape[1])))


def _pad_b(b, n):
    return jnp.pad(b, (0, n - b.shape[0]))


def _cparams(sem):
    return pltpu.CompilerParams(dimension_semantics=sem,
                                vmem_limit_bytes=_VMEM_LIMIT_BYTES)


# ------------------------------- Pallas kernels -------------------------------


def _linear_kernel(x_ref, w_ref, b_ref, o_ref, *, relu):
    acc = jnp.dot(x_ref[...].astype(jnp.bfloat16), w_ref[...],
                  preferred_element_type=jnp.float32)
    acc = acc + b_ref[...]
    if relu:
        acc = jnp.maximum(acc, 0.0)
    o_ref[...] = acc


def pallas_linear(x, w_bf16, b, *, relu, tm):
    """out = act(x @ w + b), tiled over rows; bf16 MXU inputs, f32 accumulate."""
    M, K = x.shape
    _, N = w_bf16.shape
    return pl.pallas_call(
        functools.partial(_linear_kernel, relu=relu),
        out_shape=jax.ShapeDtypeStruct((M, N), jnp.float32),
        grid=(M // tm,),
        in_specs=[
            pl.BlockSpec((tm, K), lambda i: (i, 0)),
            pl.BlockSpec((K, N), lambda i: (0, 0)),   # weight resident across tiles
            pl.BlockSpec((1, N), lambda i: (0, 0)),
        ],
        out_specs=pl.BlockSpec((tm, N), lambda i: (i, 0)),
        compiler_params=_cparams(("parallel",)),
    )(x, w_bf16, b)


def _hin_pool_kernel(h_ref, ohr_ref, ohc_ref, vn_ref, hin_ref, pooled_ref, acc_ref):
    """Fused h_in = h + vn[batch] (bf16 copy for the edge gather) + global_add_pool."""
    i = pl.program_id(0)
    # vn[batch] as a tiny one-hot matmul (0/1 exact in bf16; vn rounded to bf16).
    vn_b = jnp.dot(ohr_ref[...], vn_ref[...].astype(jnp.bfloat16),
                   preferred_element_type=jnp.float32)
    h_in = h_ref[...] + vn_b
    hin_ref[...] = h_in.astype(jnp.bfloat16)

    @pl.when(i == 0)
    def _():
        acc_ref[...] = jnp.zeros_like(acc_ref)

    # global_add_pool: pooled[g] += sum of this tile's rows belonging to graph g
    acc_ref[...] += jnp.dot(ohc_ref[...], h_in.astype(jnp.bfloat16),
                            preferred_element_type=jnp.float32)

    @pl.when(i == pl.num_programs(0) - 1)
    def _():
        pooled_ref[...] = acc_ref[...]


def pallas_hin_pool(h, oh_row, oh_col, vn, *, tm):
    M, D = h.shape
    G = vn.shape[0]
    return pl.pallas_call(
        _hin_pool_kernel,
        out_shape=(jax.ShapeDtypeStruct((M, D), jnp.bfloat16),
                   jax.ShapeDtypeStruct((G, D), jnp.float32)),
        grid=(M // tm,),
        in_specs=[
            pl.BlockSpec((tm, D), lambda i: (i, 0)),
            pl.BlockSpec((tm, G), lambda i: (i, 0)),
            pl.BlockSpec((G, tm), lambda i: (0, i)),
            pl.BlockSpec((G, D), lambda i: (0, 0)),
        ],
        out_specs=(pl.BlockSpec((tm, D), lambda i: (i, 0)),
                   pl.BlockSpec((G, D), lambda i: (0, 0))),
        scratch_shapes=[pltpu.VMEM((G, D), jnp.float32)],
        # pooled output revisits across the row axis -> reduction axis must be arbitrary
        compiler_params=_cparams(("arbitrary",)),
    )(h, oh_row, oh_col, vn)


def _message_kernel(ea_ref, hrow_ref, we_ref, be_ref, o_ref):
    # fused: edge_encoder matmul + (x_j + edge_emb) + ReLU; bf16 output for the scatter
    emb = jnp.dot(ea_ref[...], we_ref[...], preferred_element_type=jnp.float32)
    msg = jnp.maximum(hrow_ref[...].astype(jnp.float32) + emb + be_ref[...], 0.0)
    o_ref[...] = msg.astype(jnp.bfloat16)


def pallas_message(edge_attr_bf16, h_row_bf16, we, be, *, te):
    E, De = edge_attr_bf16.shape
    D = we.shape[1]
    return pl.pallas_call(
        _message_kernel,
        out_shape=jax.ShapeDtypeStruct((E, D), jnp.bfloat16),
        grid=(E // te,),
        in_specs=[
            pl.BlockSpec((te, De), lambda i: (i, 0)),
            pl.BlockSpec((te, D), lambda i: (i, 0)),
            pl.BlockSpec((De, D), lambda i: (0, 0)),
            pl.BlockSpec((1, D), lambda i: (0, 0)),
        ],
        out_specs=pl.BlockSpec((te, D), lambda i: (i, 0)),
        compiler_params=_cparams(("parallel",)),
    )(edge_attr_bf16, h_row_bf16, we, be)


def _gin_layer_kernel(off_ref, cnt_ref, col_ref, msg_ref, h_ref, ohr_ref, vn_ref,
                      w1_ref, b1_ref, w2_ref, b2_ref, o_ref, acc_ref,
                      *, one_plus_eps, relu_out):
    i = pl.program_id(0)
    k = pl.program_id(1)
    tm = h_ref.shape[0]
    te = msg_ref.shape[0]

    @pl.when(k == 0)
    def _():
        acc_ref[...] = jnp.zeros_like(acc_ref)

    # Edges are sorted by destination; block k of this tile's contiguous edge segment
    # is scatter-added via an on-the-fly (tm, te) one-hot tile (no HBM one-hot stream).
    @pl.when(k < cnt_ref[i])
    def _():
        node_ids = lax.broadcasted_iota(jnp.int32, (tm, te), 0) + i * tm
        onehot = (col_ref[...] == node_ids).astype(jnp.bfloat16)   # (1,te) vs (tm,te)
        acc_ref[...] += jnp.dot(onehot, msg_ref[...],
                                preferred_element_type=jnp.float32)

    @pl.when(k == pl.num_programs(1) - 1)
    def _():
        # recompute h_in = h + vn[batch] locally (tiny one-hot matmul, resident vn)
        vn_b = jnp.dot(ohr_ref[...], vn_ref[...].astype(jnp.bfloat16),
                       preferred_element_type=jnp.float32)
        pre = one_plus_eps * (h_ref[...] + vn_b) + acc_ref[...]
        t = jnp.dot(pre.astype(jnp.bfloat16), w1_ref[...],
                    preferred_element_type=jnp.float32) + b1_ref[...]
        t = jnp.maximum(t, 0.0)                     # mlp BN already folded into w1/b1
        out = jnp.dot(t.astype(jnp.bfloat16), w2_ref[...],
                      preferred_element_type=jnp.float32) + b2_ref[...]
        if relu_out:                                # outer BN folded into w2/b2
            out = jnp.maximum(out, 0.0)
        o_ref[...] = out


def pallas_gin_layer(blk_off, blk_cnt, col2d, msg, h, oh_row, vn,
                     w1, b1, w2, b2, *, one_plus_eps, relu_out, tm, te, kb):
    M, D = h.shape
    G = vn.shape[0]
    H = w1.shape[1]
    E_pad = msg.shape[0]
    last_blk = E_pad // te - 1

    def msg_map(i, k, off, cnt):
        return (jnp.minimum(off[i] + k, last_blk), 0)

    def col_map(i, k, off, cnt):
        return (0, jnp.minimum(off[i] + k, last_blk))

    kernel = functools.partial(_gin_layer_kernel,
                               one_plus_eps=one_plus_eps, relu_out=relu_out)
    return pl.pallas_call(
        kernel,
        out_shape=jax.ShapeDtypeStruct((M, D), jnp.float32),
        grid_spec=pltpu.PrefetchScalarGridSpec(
            num_scalar_prefetch=2,
            grid=(M // tm, kb),
            in_specs=[
                pl.BlockSpec((1, te), col_map),
                pl.BlockSpec((te, D), msg_map),
                pl.BlockSpec((tm, D), lambda i, k, off, cnt: (i, 0)),
                pl.BlockSpec((tm, G), lambda i, k, off, cnt: (i, 0)),
                pl.BlockSpec((G, D), lambda i, k, off, cnt: (0, 0)),
                pl.BlockSpec((D, H), lambda i, k, off, cnt: (0, 0)),
                pl.BlockSpec((1, H), lambda i, k, off, cnt: (0, 0)),
                pl.BlockSpec((H, D), lambda i, k, off, cnt: (0, 0)),
                pl.BlockSpec((1, D), lambda i, k, off, cnt: (0, 0)),
            ],
            out_specs=pl.BlockSpec((tm, D), lambda i, k, off, cnt: (i, 0)),
            scratch_shapes=[pltpu.VMEM((tm, D), jnp.float32)],
        ),
        compiler_params=_cparams(("parallel", "arbitrary")),
    )(blk_off, blk_cnt, col2d, msg, h, oh_row, vn, w1, b1, w2, b2)


def _vn_update_kernel(pool_ref, vn_ref, w1_ref, b1_ref, w2_ref, b2_ref, o_ref):
    vt = pool_ref[...] + vn_ref[...]
    t = jnp.maximum(
        jnp.dot(vt.astype(jnp.bfloat16), w1_ref[...],
                preferred_element_type=jnp.float32) + b1_ref[...], 0.0)
    out = jnp.maximum(
        jnp.dot(t.astype(jnp.bfloat16), w2_ref[...],
                preferred_element_type=jnp.float32) + b2_ref[...], 0.0)
    o_ref[...] = out


def pallas_vn_update(pooled, vn, w1, b1, w2, b2):
    G, D = vn.shape
    H = w1.shape[1]
    return pl.pallas_call(
        _vn_update_kernel,
        out_shape=jax.ShapeDtypeStruct((G, D), jnp.float32),
        grid=(1,),
        in_specs=[
            pl.BlockSpec((G, D), lambda i: (0, 0)),
            pl.BlockSpec((G, D), lambda i: (0, 0)),
            pl.BlockSpec((D, H), lambda i: (0, 0)),
            pl.BlockSpec((1, H), lambda i: (0, 0)),
            pl.BlockSpec((H, D), lambda i: (0, 0)),
            pl.BlockSpec((1, D), lambda i: (0, 0)),
        ],
        out_specs=pl.BlockSpec((G, D), lambda i: (0, 0)),
        compiler_params=_cparams(("arbitrary",)),
    )(pooled, vn, w1, b1, w2, b2)


# ------------------------------- parameter init -------------------------------


def _lin_init(key, fan_in, fan_out):
    k1, k2 = jax.random.split(key)
    return {
        "w": 0.1 * jax.random.normal(k1, (fan_in, fan_out), jnp.float32),
        "b": 0.1 * jax.random.normal(k2, (fan_out,), jnp.float32),
    }


def _bn_init(key, dim):
    k1, k2, k3, k4 = jax.random.split(key, 4)
    return {
        "gamma": 1.0 + 0.1 * jax.random.normal(k1, (dim,), jnp.float32),
        "beta": 0.1 * jax.random.normal(k2, (dim,), jnp.float32),
        "mean": 0.1 * jax.random.normal(k3, (dim,), jnp.float32),
        "var": 0.5 + jnp.abs(jax.random.normal(k4, (dim,), jnp.float32)),
    }


def init_params(key, num_layer, emb_dim, input_dim, edge_dim):
    keys = jax.random.split(key, 4 + 8 * num_layer)
    ki = iter(keys)
    params = {
        "node_encoder": _lin_init(next(ki), input_dim, emb_dim),
        # torch.nn.init.constant_(virtualnode_embedding.weight, 0)
        "virtualnode_embedding": jnp.zeros((1, emb_dim), jnp.float32),
        "convs": [],
        "batch_norms": [],
        "mlp_virtualnode": [],
    }
    for _ in range(num_layer):
        params["convs"].append({
            "eps": 0.0,  # torch.nn.Parameter(torch.Tensor([0]))
            "edge_encoder": _lin_init(next(ki), edge_dim, emb_dim),
            "mlp_lin1": _lin_init(next(ki), emb_dim, 2 * emb_dim),
            "mlp_bn": _bn_init(next(ki), 2 * emb_dim),
            "mlp_lin2": _lin_init(next(ki), 2 * emb_dim, emb_dim),
        })
        params["batch_norms"].append(_bn_init(next(ki), emb_dim))
    for _ in range(num_layer - 1):
        params["mlp_virtualnode"].append({
            "lin1": _lin_init(next(ki), emb_dim, 2 * emb_dim),
            "bn1": _bn_init(next(ki), 2 * emb_dim),
            "lin2": _lin_init(next(ki), 2 * emb_dim, emb_dim),
            "bn2": _bn_init(next(ki), emb_dim),
        })
    return params


def _fold_bn_into_linear(lin, bn, eps=_BN_EPS):
    """Eval-mode BN folded into the preceding Linear: y = (x@w+b)*s + t."""
    s = bn["gamma"] / jnp.sqrt(bn["var"] + eps)
    t = bn["beta"] - bn["mean"] * s
    return lin["w"] * s[None, :], lin["b"] * s + t


def prepare_params(params, emb_dim, input_dim, edge_dim):
    """Fold BN, pad feature dims to 128 lanes, cast matmul weights to bf16."""
    D = _round_up(emb_dim, 128)
    H = _round_up(2 * emb_dim, 128)
    In = _round_up(input_dim, 8)
    De = _round_up(edge_dim, 8)

    def wpack(w, rows, cols):
        return _pad_w(w, rows, cols).astype(jnp.bfloat16)

    def bpack(b, n):
        return _pad_b(b, n).reshape(1, n).astype(jnp.float32)

    fast = {
        "emb_dim": emb_dim, "D": D, "H": H, "In": In, "De": De,
        "enc_w": wpack(params["node_encoder"]["w"], In, D),
        "enc_b": bpack(params["node_encoder"]["b"], D),
        "vn0": _pad_b(params["virtualnode_embedding"][0], D),
        "convs": [],
        "vn_mlps": [],
    }
    for layer, conv in enumerate(params["convs"]):
        w1, b1 = _fold_bn_into_linear(conv["mlp_lin1"], conv["mlp_bn"])
        w2, b2 = _fold_bn_into_linear(conv["mlp_lin2"], params["batch_norms"][layer])
        fast["convs"].append({
            "edge_w": wpack(conv["edge_encoder"]["w"], De, D),
            "edge_b": bpack(conv["edge_encoder"]["b"], D),
            "w1": wpack(w1, D, H), "b1": bpack(b1, H),
            "w2": wpack(w2, H, D), "b2": bpack(b2, D),
            # baked as a Python float: valid for eval / frozen eps
            "one_plus_eps": 1.0 + float(conv["eps"]),
        })
    for mvn in params["mlp_virtualnode"]:
        wv1, bv1 = _fold_bn_into_linear(mvn["lin1"], mvn["bn1"])
        wv2, bv2 = _fold_bn_into_linear(mvn["lin2"], mvn["bn2"])
        fast["vn_mlps"].append({
            "w1": wpack(wv1, D, H), "b1": bpack(bv1, H),
            "w2": wpack(wv2, H, D), "b2": bpack(bv2, D),
        })
    return fast


# ------------------------------- graph preparation -------------------------------


def prepare_graph(edge_index, batch, num_nodes, num_graphs, *,
                  node_tile_pref=512, edge_tile_pref=1024):
    """Host-side (static) graph prep: sort edges by destination, compute per-node-tile
    edge-segment block offsets/counts for scalar prefetch, build tiny batch one-hots.
    Cacheable across forward calls / layers for a fixed graph batch."""
    row = np.asarray(edge_index[0]).astype(np.int64)
    col = np.asarray(edge_index[1]).astype(np.int64)
    batch_np = np.asarray(batch).astype(np.int64)
    N, E, G = int(num_nodes), int(row.shape[0]), int(num_graphs)

    M_pad, tm = _pick_tile(N, node_tile_pref, 16)
    E_pad, te = _pick_tile(E, edge_tile_pref, 128)
    G_pad = _round_up(G, 16)
    NT = M_pad // tm

    # sort edges by destination so each node tile owns a contiguous edge segment
    order = np.argsort(col, kind="stable")
    col_s = col[order]
    row_s = row[order]

    col_pad = np.full((E_pad,), M_pad, dtype=np.int32)   # sentinel never matches a node
    col_pad[:E] = col_s
    row_pad = np.zeros((E_pad,), dtype=np.int32)
    row_pad[:E] = row_s

    starts = np.searchsorted(col_pad, np.arange(NT) * tm, side="left")
    ends = np.searchsorted(col_pad, (np.arange(NT) + 1) * tm, side="left")
    blk_off = (starts // te).astype(np.int32)
    blk_cnt = np.where(ends > starts,
                       (ends - 1) // te - starts // te + 1, 0).astype(np.int32)
    kb = max(1, int(blk_cnt.max()))

    # batch one-hots (0/1 exact in bf16); padded nodes map to no graph
    batch_pad = np.full((M_pad,), G_pad, dtype=np.int32)
    batch_pad[:N] = batch_np
    oh_row = (batch_pad[:, None] == np.arange(G_pad)[None, :]).astype(np.float32)

    return {
        "N": N, "E": E, "G": G,
        "M_pad": M_pad, "E_pad": E_pad, "G_pad": G_pad,
        "tm": tm, "te": te, "kb": kb,
        "order": jnp.asarray(order.astype(np.int32)),
        "row_sorted": jnp.asarray(row_pad),
        "col2d": jnp.asarray(col_pad.reshape(1, E_pad)),
        "blk_off": jnp.asarray(blk_off),
        "blk_cnt": jnp.asarray(blk_cnt),
        "oh_row": jnp.asarray(oh_row).astype(jnp.bfloat16),
        "oh_col": jnp.asarray(oh_row.T.copy()).astype(jnp.bfloat16),
    }


# --------------------------------- forward pass ---------------------------------


def gnn_node_virtualnode_forward(fast, graph, x, edge_attr, num_layer):
    D, In, De = fast["D"], fast["In"], fast["De"]
    N, E = graph["N"], graph["E"]
    M_pad, E_pad, G_pad = graph["M_pad"], graph["E_pad"], graph["G_pad"]
    tm, te, kb = graph["tm"], graph["te"], graph["kb"]

    # pad inputs; edge_attr is re-ordered once to the destination-sorted edge order
    x_p = jnp.zeros((M_pad, In), jnp.float32).at[:N, :x.shape[1]].set(x)
    ea_sorted = jnp.take(edge_attr, graph["order"], axis=0)
    ea_p = (jnp.zeros((E_pad, De), jnp.float32)
            .at[:E, :edge_attr.shape[1]].set(ea_sorted)).astype(jnp.bfloat16)

    # virtualnode_embedding(zeros) -> row 0 of the (zero-initialized) embedding table
    vn = jnp.zeros((G_pad, D), jnp.float32) + fast["vn0"][None, :]

    # node encoder (Linear)
    h = pallas_linear(x_p, fast["enc_w"], fast["enc_b"], relu=False, tm=tm)

    for layer in range(num_layer):
        cp = fast["convs"][layer]

        # fused: h_in = h + vn[batch] (bf16 copy for the edge gather) + global_add_pool
        h_in_bf16, pooled = pallas_hin_pool(h, graph["oh_row"], graph["oh_col"],
                                            vn, tm=tm)

        # TODO(synk): h_in[row] gather is still XLA glue; an SMEM-index-driven DMA
        #             gather inside MESSAGE would remove this [E, D] HBM round trip.
        h_row = jnp.take(h_in_bf16, graph["row_sorted"], axis=0)

        # fused edge-encoder matmul + relu(x_j + edge_emb); sorted edge order
        msg = pallas_message(ea_p, h_row, cp["edge_w"], cp["edge_b"], te=te)

        # fused segment scatter-add (sorted edges + on-the-fly one-hot) + (1+eps)*h_in
        # + GIN MLP (BN folded) + outer BN(+ReLU)
        h = pallas_gin_layer(graph["blk_off"], graph["blk_cnt"], graph["col2d"],
                             msg, h, graph["oh_row"], vn,
                             cp["w1"], cp["b1"], cp["w2"], cp["b2"],
                             one_plus_eps=cp["one_plus_eps"],
                             relu_out=(layer != num_layer - 1),
                             tm=tm, te=te, kb=kb)
        # dropout is identity in eval mode

        # virtual-node update: tiny (G, D) MLP on the already-pooled sums
        if layer < num_layer - 1:
            vp = fast["vn_mlps"][layer]
            vn = pallas_vn_update(pooled, vn, vp["w1"], vp["b1"], vp["w2"], vp["b2"])

    return h[:N, :fast["emb_dim"]]  # JK == 'last'


# ----------------------------- pure-JAX f32 reference -----------------------------


def _ref_lin(p, x, relu=False):
    y = x @ p["w"] + p["b"]
    return jnp.maximum(y, 0.0) if relu else y


def _ref_bn(p, x, relu=False, eps=_BN_EPS):
    y = (x - p["mean"]) / jnp.sqrt(p["var"] + eps) * p["gamma"] + p["beta"]
    return jnp.maximum(y, 0.0) if relu else y


def ref_forward(params, x, edge_index, edge_attr, batch, num_graphs, num_layer):
    row, col = edge_index[0], edge_index[1]
    N = x.shape[0]
    vn = jnp.zeros((num_graphs, params["virtualnode_embedding"].shape[1]), jnp.float32)
    h_list = [_ref_lin(params["node_encoder"], x)]
    for layer in range(num_layer):
        h_cur = h_list[layer] + vn[batch]
        h_list[layer] = h_cur
        conv = params["convs"][layer]
        edge_emb = _ref_lin(conv["edge_encoder"], edge_attr)
        msg = jnp.maximum(h_cur[row] + edge_emb, 0.0)
        agg = jax.ops.segment_sum(msg, col, num_segments=N)
        pre = (1.0 + conv["eps"]) * h_cur + agg
        t = _ref_bn(conv["mlp_bn"], _ref_lin(conv["mlp_lin1"], pre), relu=True)
        h = _ref_lin(conv["mlp_lin2"], t)
        h = _ref_bn(params["batch_norms"][layer], h, relu=(layer != num_layer - 1))
        h_list.append(h)
        if layer < num_layer - 1:
            pooled = jax.ops.segment_sum(h_cur, batch, num_segments=num_graphs)
            vn_temp = pooled + vn
            mvn = params["mlp_virtualnode"][layer]
            t = _ref_bn(mvn["bn1"], _ref_lin(mvn["lin1"], vn_temp), relu=True)
            vn = _ref_bn(mvn["bn2"], _ref_lin(mvn["lin2"], t), relu=True)
    return h_list[-1]


# ------------------------------------- main -------------------------------------

if __name__ == "__main__":
    num_layer = 3
    emb_dim = 32
    input_dim = 8
    edge_dim = 4
    num_nodes = 16
    num_edges = 32
    num_graphs = 2

    key = jax.random.PRNGKey(0)
    k_param, k_x, k_e, k_r, k_c = jax.random.split(key, 5)

    params = init_params(k_param, num_layer, emb_dim, input_dim, edge_dim)
    fast = prepare_params(params, emb_dim, input_dim, edge_dim)

    x = jax.random.normal(k_x, (num_nodes, input_dim), jnp.float32)
    edge_attr = jax.random.normal(k_e, (num_edges, edge_dim), jnp.float32)
    row = jax.random.randint(k_r, (num_edges,), 0, num_nodes)
    col = jax.random.randint(k_c, (num_edges,), 0, num_nodes)
    edge_index = jnp.stack([row, col], axis=0)
    batch = jnp.concatenate(
        [jnp.zeros((num_nodes // 2,), jnp.int32),
         jnp.ones((num_nodes - num_nodes // 2,), jnp.int32)]
    )

    graph = prepare_graph(edge_index, batch, num_nodes, num_graphs)

    out = gnn_node_virtualnode_forward(fast, graph, x, edge_attr, num_layer)
    out = jax.block_until_ready(out)

    ref = ref_forward(params, x, edge_index, edge_attr, batch, num_graphs, num_layer)
    assert out.shape == (num_nodes, emb_dim)
    err = float(jnp.max(jnp.abs(out - ref)))
    scale = float(jnp.max(jnp.abs(ref)))
    # bf16 MXU operands / activations with f32 accumulation vs. a pure-f32 reference
    assert err <= 5e-2 * max(scale, 1.0), (err, scale)

    print("KERNEL_OK")
</pallas_src>

<mosaic_0001>
module attributes {stable_mosaic.version = 11 : i64} {
  func.func @_linear_kernel(%arg0: i32, %arg1: memref<16x8xf32, #tpu.memory_space<vmem>>, %arg2: memref<8x128xbf16, #tpu.memory_space<vmem>>, %arg3: memref<1x128xf32, #tpu.memory_space<vmem>>, %arg4: memref<16x128xf32, #tpu.memory_space<vmem>>) attributes {dimension_semantics = [#tpu.dimension_semantics<parallel>], iteration_bounds = array<i64: 1>, scalar_prefetch = 0 : i64, scratch_operands = 0 : i64, tpu.core_type = #tpu.core_type<tc>, window_params = [{transform_indices = @transform_0, window_bounds = array<i64: 16, 8>}, {pipeline_mode = #tpu.pipeline_mode<synchronous>, transform_indices = @transform_1, window_bounds = array<i64: 8, 128>}, {pipeline_mode = #tpu.pipeline_mode<synchronous>, transform_indices = @transform_2, window_bounds = array<i64: 1, 128>}, {transform_indices = @transform_3, window_bounds = array<i64: 16, 128>}]} {
    %c0 = arith.constant 0 : index
    %c0_0 = arith.constant 0 : index
    %0 = vector.load %arg1[%c0, %c0_0] : memref<16x8xf32, #tpu.memory_space<vmem>>, vector<16x8xf32>
    %1 = arith.truncf %0 : vector<16x8xf32> to vector<16x8xbf16>
    %c0_1 = arith.constant 0 : index
    %c0_2 = arith.constant 0 : index
    %2 = vector.load %arg2[%c0_1, %c0_2] : memref<8x128xbf16, #tpu.memory_space<vmem>>, vector<8x128xbf16>
    %cst = arith.constant dense<0.000000e+00> : vector<16x128xf32>
    %3 = tpu.matmul %1, %2, %cst {dimension_numbers = #tpu.dot_dimension_numbers<[1], [0], [0], [1], [0, 0, 1, 1], [], []>} : vector<16x8xbf16>, vector<8x128xbf16>, vector<16x128xf32> -> vector<16x128xf32>
    %c0_3 = arith.constant 0 : index
    %c0_4 = arith.constant 0 : index
    %4 = vector.load %arg3[%c0_3, %c0_4] : memref<1x128xf32, #tpu.memory_space<vmem>>, vector<1x128xf32>
    %5 = vector.broadcast %4 : vector<1x128xf32> to vector<16x128xf32>
    %6 = arith.addf %3, %5 : vector<16x128xf32>
    %c0_5 = arith.constant 0 : index
    %c0_6 = arith.constant 0 : index
    %7 = vector.load %arg4[%c0_5, %c0_6] : memref<16x128xf32, #tpu.memory_space<vmem>>, vector<16x128xf32>
    tpu.vector_store %arg4[%c0_5, %c0_6], %6 {strides = array<i32>} : memref<16x128xf32, #tpu.memory_space<vmem>>, vector<16x128xf32>,
    return
  }
  func.func @transform_0(%arg0: i32) -> (i32, i32) {
    %c0_i32 = arith.constant 0 : i32
    %c0_i32_0 = arith.constant 0 : i32
    return %arg0, %c0_i32 : i32, i32
  }
  func.func @transform_1(%arg0: i32) -> (i32, i32) {
    %c0_i32 = arith.constant 0 : i32
    %c0_i32_0 = arith.constant 0 : i32
    %c0_i32_1 = arith.constant 0 : i32
    return %c0_i32, %c0_i32_0 : i32, i32
  }
  func.func @transform_2(%arg0: i32) -> (i32, i32) {
    %c0_i32 = arith.constant 0 : i32
    %c0_i32_0 = arith.constant 0 : i32
    %c0_i32_1 = arith.constant 0 : i32
    return %c0_i32, %c0_i32_0 : i32, i32
  }
  func.func @transform_3(%arg0: i32) -> (i32, i32) {
    %c0_i32 = arith.constant 0 : i32
    %c0_i32_0 = arith.constant 0 : i32
    return %arg0, %c0_i32 : i32, i32
  }
}

</mosaic_0001>

<llo_original>
// kernel: tpu_custom_call.1
$region0: #{tpu_custom_call.1}
  #allocation0 [shape = 'u32[]', space=smem, size = 0x4, offset = 0x4, fixed_abs, tag = 'smem constant byte address 0x4 - core index']
  #allocation1 [shape = 'u32[72,128]{1,0:T(1,128)}', space=vmem, size = 0x9000, scoped, tag = 'internal scratch']
  %s0 = inlined_call_operand.vmem [shape: f32[16,8], index: 0, kind: input, shape index: {}]
  %s1 = inlined_call_operand.vmem [shape: bf16[8,128], index: 1, kind: input, shape index: {}]
  %s2 = inlined_call_operand.vmem [shape: f32[1,128], index: 2, kind: input, shape index: {}]
  %s3 = inlined_call_operand.hbm [shape: f32[16,128], index: 3, kind: output, shape index: {}]
  %s4 = sld [smem:[#allocation0]]
  $region22: #{tpu_custom_call.1} parent=0
    _
  %s6 = ssub.s32 1, %s4
  %s7 = scalar_select 0, %s6, %s4
  $region1: #{tpu_custom_call.1} parent=0
    #allocation2 [shape = 'u8[8192]{0}', space=vmem, size = 0x2000, scoped, tag = 'output window, operand 0, single buffered']
    #allocation3 [shape = 's32[1]{0}', space=sflag, size = 0x4, scoped, tag = 'scoped memory for tpu_custom_call.1']
    %8 = vsyncpa [#allocation3], 0
    // Predicated region
    $region2: #{tpu_custom_call.1} parent=1 // pred_check
      _
    $region3: #{tpu_custom_call.1} parent=1 // pred_check_branch
      %10 = sbr.rel (0) target = $region5
    $region4: #{tpu_custom_call.1} parent=1 // pred_region
      _
    $region5: #{tpu_custom_call.1} parent=1 // pred_fallthru
      _
    // Predicated region
    $region6: #{tpu_custom_call.1} parent=1 // pred_check
      _
    $region7: #{tpu_custom_call.1} parent=1 // pred_check_branch
      %12 = sbr.rel (0) target = $region9
    $region8: #{tpu_custom_call.1} parent=1 // pred_region
      _
    $region9: #{tpu_custom_call.1} parent=1 // pred_fallthru
      _
    // Predicated region
    $region10: #{tpu_custom_call.1} parent=1 // pred_check
      _
    $region11: #{tpu_custom_call.1} parent=1 // pred_check_branch
      %14 = sbr.rel (0) target = $region13
    $region12: #{tpu_custom_call.1} parent=1 // pred_region
      _
    $region13: #{tpu_custom_call.1} parent=1 // pred_fallthru
      _
    %v16 = vld [vmem:[%s0] sm:$0xff]
    %v17 = vld [vmem:[%s0 + $0x8] sm:$0xff]
    %v18 = vpack.c.bf16 %v17, %v16
    %v19 = vld [vmem:[%s1] sm:$0xf]
    %v20 = vld [vmem:[%s2] sm:$0x1]
    %v22 = vperm.slane %v20, 0
    %vm24 = vcmask 64512
    %v26 = vsel %vm24, %v18, 0
    %vm28 = vcmask 1043456
    %v30 = vsel %vm28, %v19, 0
    %32 = vmatpush.bf16.msra.mxu0 0
    %33 = vmatpush.bf16.msra.mxu0 0
    %34 = vmatpush.bf16.msra.mxu0 0
    %35 = vmatpush.bf16.msra.mxu0 0
    %36 = vmatpush.bf16.msra.mxu0 0
    %37 = vmatpush.bf16.msra.mxu0 0
    %38 = vmatpush.bf16.msra.mxu0 0
    %39 = vmatpush.bf16.msra.mxu0 %v30
    %40 = vmatmul.bf16.gmra.mxu0 %v26
    %v41 = vpop.f32.mrf.mxu0
    %v42 = vadd.f32 %v22, %v41
    %v43 = vpop.f32.mrf.mxu0
    %v44 = vadd.f32 %v22, %v43
    %45 = vdwg.mxu0
    %46 = vst [vmem:[#allocation2] sm:$0xff] %v42
    %47 = vst [vmem:[#allocation2 + $0x8] sm:$0xff] %v44
    // Predicated region
    $region14: #{tpu_custom_call.1} parent=1 // pred_check
      _
    $region15: #{tpu_custom_call.1} parent=1 // pred_check_branch
      %49 = sbr.rel (0) target = $region17
    $region16: #{tpu_custom_call.1} parent=1 // pred_region
      %51 = vsyncadd [#allocation3], 0
      %s52 = sshll.u32 [#allocation2], 4
      %s53 = int_to_ptr.vmem [resolvable:$true] %s52
      %s54 = sshll.u32 %s3, 4
      %s55 = int_to_ptr.hbm [resolvable:$true] %s54
      %60 = dma.vmem_to_hbm [thread:$0]  %s53, 256, %s55, [#allocation3], 128, 128, 8
    $region17: #{tpu_custom_call.1} parent=1 // pred_fallthru
      _
    // Predicated region
    $region18: #{tpu_custom_call.1} parent=1 // pred_check
      _
    $region19: #{tpu_custom_call.1} parent=1 // pred_check_branch
      %62 = sbr.rel (0) target = $region21
    $region20: #{tpu_custom_call.1} parent=1 // pred_region
      %64 = dma.done [#allocation3], 256
    $region21: #{tpu_custom_call.1} parent=1 // pred_fallthru
      _
    %65 = vsyncpa [#allocation3], 1

</llo_original>
